<compile_context>
chip_gen: v5e
topology: v5e:2x2
jax: 0.10.0
libtpu: 0.0.40
codegen_flags: <defaults>
</compile_context>

<pallas_src>
import functools

import jax
import jax.numpy as jnp
from jax import lax
from jax.experimental import pallas as pl
from jax.experimental.pallas import tpu as pltpu


def _partial_gram_kernel(f_ref, gram_ref, *, tk, hw, kps, needs_mask):
    """Accumulate one (NC, TK) feature tile into this split's partial Gram.

    f_ref:    (NC, TK) f32 feature tile streamed along HW
    gram_ref: (NC, NC) f32 partial-Gram output block (resident accumulator)
    """
    k = pl.program_id(1)

    @pl.when(k == 0)
    def _():
        gram_ref[...] = jnp.zeros_like(gram_ref)

    f = f_ref[...]
    if needs_mask:
        # Zero out columns past the true HW extent (ragged last tile and any
        # fully-out-of-range overhang tile whose block index was clamped).
        split = pl.program_id(0)
        start = (split * kps + k) * tk
        col = lax.broadcasted_iota(jnp.int32, f.shape, 1)
        f = jnp.where(col < (hw - start), f, 0.0)

    fb = f.astype(jnp.bfloat16)  # in-kernel cast: half MXU-feed width, f32 accum
    # Contract the last dim of both operands -> no explicit transpose before MXU.
    gram_ref[...] += lax.dot_general(
        fb, fb,
        dimension_numbers=(((1,), (1,)), ((), ())),
        preferred_element_type=jnp.float32,
    )


def gram_matrix(x):
    """Plain-JAX f32 Gram matrix (used to build the style target)."""
    n, c, h, w = x.shape
    f = x.reshape(n * c, h * w).astype(jnp.float32)
    return (f @ f.T) / float(n * c * h * w)


def _vmem_capacity_bytes():
    """Physical VMEM of the local chip; conservative fallback if unavailable."""
    try:
        return int(pltpu.get_tpu_info().vmem_capacity_bytes)
    except Exception:
        return 64 * 1024 * 1024  # v7x per-core VMEM: safe lower bound


def _choose_hw_tile(nc, hw, vmem_capacity):
    """Lane-aligned HW tile sized from the chip's VMEM (~35% for the F buffers:
    ~22 MiB on v7x, ~45 MiB on v5e/v6e), shrunk to the (lane-rounded) HW."""
    lane = 128
    nc8 = -(-nc // 8) * 8
    f_budget = max(4 << 20, int(vmem_capacity * 0.35))
    max_tk = max(lane, (f_budget // (2 * 4 * nc8)) // lane * lane)  # 2 bufs, f32
    hw_lanes = -(-hw // lane) * lane
    return min(max_tk, hw_lanes)


def style_loss(x, target_gram, weight, *, hw_tile=None, n_split=2):
    """weight * MSE(gram(x), target_gram). x is NCHW, target_gram is (N*C, N*C)."""
    n, c, h, w = x.shape
    nc, hw = n * c, h * w
    vmem_cap = _vmem_capacity_bytes()

    if hw_tile is None:
        tk = _choose_hw_tile(nc, hw, vmem_cap)
    else:
        tk = int(hw_tile)
        if tk % 128 != 0:
            raise ValueError("hw_tile must be a multiple of 128 (lane width)")

    num_hw_blocks = pl.cdiv(hw, tk)
    n_split = max(1, min(int(n_split), num_hw_blocks))  # v7x: one per TensorCore
    kps = pl.cdiv(num_hw_blocks, n_split)               # K tiles per split
    needs_mask = (hw % tk != 0) or (n_split * kps != num_hw_blocks)

    # f32 features streamed straight from HBM (no cast / pad round trip).
    f = x.reshape(nc, hw)

    kernel = functools.partial(
        _partial_gram_kernel, tk=tk, hw=hw, kps=kps, needs_mask=needs_mask)

    def f_index_map(s, k):
        # Clamp so a fully-masked overhang tile never requests an OOB block.
        return (0, jnp.minimum(s * kps + k, num_hw_blocks - 1))

    # VMEM accounting: double-buffered f32 F tile + double-buffered f32 output
    # (the partial-Gram accumulator), including sublane/lane layout padding.
    nc8 = -(-nc // 8) * 8
    nc128 = -(-nc // 128) * 128
    vmem_bytes = 2 * nc8 * tk * 4 + 2 * nc8 * nc128 * 4 + (2 << 20)
    vmem_bytes = int(min(max(vmem_bytes, 8 << 20), int(0.9 * vmem_cap)))

    partial = pl.pallas_call(
        kernel,
        out_shape=jax.ShapeDtypeStruct((n_split, nc, nc), jnp.float32),
        grid_spec=pltpu.PrefetchScalarGridSpec(
            num_scalar_prefetch=0,
            grid=(n_split, kps),
            # F is the only kernel input; sweep pipeline_mode=pl.Buffered(3)
            # here if profiling shows exposed DMA at step boundaries.
            in_specs=[pl.BlockSpec((nc, tk), f_index_map)],
            out_specs=pl.BlockSpec((None, nc, nc), lambda s, k: (s, 0, 0)),
        ),
        compiler_params=pltpu.CompilerParams(
            dimension_semantics=("parallel", "arbitrary"),  # split x reduction
            vmem_limit_bytes=vmem_bytes,
        ),
    )(f)

    # Tiny (NC^2) epilogue in plain JAX: combine per-split partial Grams,
    # normalize, MSE against the (already-Gram) target, apply the style weight.
    g = partial.sum(axis=0) / float(nc * hw)
    diff = g - target_gram.astype(jnp.float32)
    return weight * jnp.mean(diff * diff)


def _ref_style_loss_bf16(x, target, weight):
    """Plain-JAX reference matching the kernel's bf16-operand / f32-accum matmul."""
    n, c, h, w = x.shape
    f = x.reshape(n * c, h * w).astype(jnp.bfloat16)
    g = lax.dot_general(
        f, f, dimension_numbers=(((1,), (1,)), ((), ())),
        preferred_element_type=jnp.float32,
    ) / float(n * c * h * w)
    return weight * jnp.mean((g - target.astype(jnp.float32)) ** 2)


if __name__ == "__main__":
    key = jax.random.PRNGKey(0)
    k_x, k_style, k_x2, k_style2 = jax.random.split(key, 4)

    # Small shapes consistent with a CNN feature map: batch=2, channels=4, 16x16.
    N, C, H, W = 2, 4, 16, 16
    x = jax.random.normal(k_x, (N, C, H, W), dtype=jnp.float32)
    style_features = jax.random.normal(k_style, (N, C, H, W), dtype=jnp.float32)

    target = gram_matrix(style_features)   # target is already a Gram matrix
    weight = 1000.0
    ref = jax.block_until_ready(_ref_style_loss_bf16(x, target, weight))

    # 1) Auto-chosen tile: single K tile, split axis collapses to 1.
    loss = jax.block_until_ready(style_loss(x, target, weight))
    assert jnp.allclose(loss, ref, rtol=1e-3, atol=1e-3), (loss, ref)

    # 2) Forced 128-wide K tile: two K tiles -> one per split ("parallel" axis,
    #    i.e. one per TensorCore on v7x, sequential on v5e/v6e).
    loss_split = jax.block_until_ready(style_loss(x, target, weight, hw_tile=128))
    assert jnp.allclose(loss_split, ref, rtol=1e-3, atol=1e-3), (loss_split, ref)

    # 3) Ragged HW (12x12 = 144, not a multiple of 128): exercises the in-kernel
    #    iota zero-mask on the partial last tile, with no wrapper-side padding.
    H2 = W2 = 12
    x2 = jax.random.normal(k_x2, (N, C, H2, W2), dtype=jnp.float32)
    target2 = gram_matrix(jax.random.normal(k_style2, (N, C, H2, W2),
                                            dtype=jnp.float32))
    ref2 = jax.block_until_ready(_ref_style_loss_bf16(x2, target2, weight))
    loss2 = jax.block_until_ready(style_loss(x2, target2, weight, hw_tile=128))
    assert jnp.allclose(loss2, ref2, rtol=1e-3, atol=1e-3), (loss2, ref2)

    print("KERNEL_OK")
</pallas_src>

<mosaic_0001>
module attributes {stable_mosaic.version = 11 : i64} {
  func.func @_partial_gram_kernel(%arg0: i32, %arg1: i32, %arg2: memref<8x256xf32, #tpu.memory_space<vmem>>, %arg3: memref<1x8x8xf32, #tpu.memory_space<vmem>>) attributes {dimension_semantics = [#tpu.dimension_semantics<parallel>, #tpu.dimension_semantics<arbitrary>], iteration_bounds = array<i64: 1, 1>, scalar_prefetch = 0 : i64, scratch_operands = 0 : i64, tpu.core_type = #tpu.core_type<tc>, window_params = [{transform_indices = @transform_0, window_bounds = array<i64: 8, 256>}, {transform_indices = @transform_1, window_bounds = array<i64: 1, 8, 8>}]} {
    %c0_i32 = arith.constant 0 : i32
    %0 = arith.cmpi eq, %arg1, %c0_i32 : i32
    %1 = arith.extui %0 : i1 to i32
    %c0_i32_0 = arith.constant 0 : i32
    %2 = arith.cmpi ne, %1, %c0_i32_0 : i32
    scf.if %2 {
      %cst_8 = arith.constant 0.000000e+00 : f32
      %12 = vector.broadcast %cst_8 : f32 to vector<8x8xf32>
      %c0_9 = arith.constant 0 : index
      %c0_10 = arith.constant 0 : index
      %c0_11 = arith.constant 0 : index
      %13 = vector.load %arg3[%c0_9, %c0_10, %c0_11] : memref<1x8x8xf32, #tpu.memory_space<vmem>>, vector<1x8x8xf32>
      %14 = vector.shape_cast %13 : vector<1x8x8xf32> to vector<8x8xf32>
      %15 = vector.shape_cast %12 : vector<8x8xf32> to vector<1x8x8xf32>
      tpu.vector_store %arg3[%c0_9, %c0_10, %c0_11], %15 {strides = array<i32>} : memref<1x8x8xf32, #tpu.memory_space<vmem>>, vector<1x8x8xf32>,
    } else {
    }
    %c0 = arith.constant 0 : index
    %c0_1 = arith.constant 0 : index
    %3 = vector.load %arg2[%c0, %c0_1] : memref<8x256xf32, #tpu.memory_space<vmem>>, vector<8x256xf32>
    %4 = arith.truncf %3 : vector<8x256xf32> to vector<8x256xbf16>
    %c0_2 = arith.constant 0 : index
    %c0_3 = arith.constant 0 : index
    %c0_4 = arith.constant 0 : index
    %5 = vector.load %arg3[%c0_2, %c0_3, %c0_4] : memref<1x8x8xf32, #tpu.memory_space<vmem>>, vector<1x8x8xf32>
    %6 = vector.shape_cast %5 : vector<1x8x8xf32> to vector<8x8xf32>
    %cst = arith.constant dense<0.000000e+00> : vector<8x8xf32>
    %7 = tpu.matmul %4, %4, %cst {dimension_numbers = #tpu.dot_dimension_numbers<[1], [1], [0], [0], [0, 0, 1, 0], [], []>} : vector<8x256xbf16>, vector<8x256xbf16>, vector<8x8xf32> -> vector<8x8xf32>
    %8 = arith.addf %6, %7 : vector<8x8xf32>
    %c0_5 = arith.constant 0 : index
    %c0_6 = arith.constant 0 : index
    %c0_7 = arith.constant 0 : index
    %9 = vector.load %arg3[%c0_5, %c0_6, %c0_7] : memref<1x8x8xf32, #tpu.memory_space<vmem>>, vector<1x8x8xf32>
    %10 = vector.shape_cast %9 : vector<1x8x8xf32> to vector<8x8xf32>
    %11 = vector.shape_cast %8 : vector<8x8xf32> to vector<1x8x8xf32>
    tpu.vector_store %arg3[%c0_5, %c0_6, %c0_7], %11 {strides = array<i32>} : memref<1x8x8xf32, #tpu.memory_space<vmem>>, vector<1x8x8xf32>,
    return
  }
  func.func @transform_0(%arg0: i32, %arg1: i32) -> (i32, i32) {
    %c1_i32 = arith.constant 1 : i32
    %0 = arith.muli %arg0, %c1_i32 : i32
    %1 = arith.addi %0, %arg1 : i32
    %c0_i32 = arith.constant 0 : i32
    %2 = arith.minsi %1, %c0_i32 : i32
    %c0_i32_0 = arith.constant 0 : i32
    %c0_i32_1 = arith.constant 0 : i32
    return %c0_i32_0, %2 : i32, i32
  }
  func.func @transform_1(%arg0: i32, %arg1: i32) -> (i32, i32, i32) {
    %c0_i32 = arith.constant 0 : i32
    %c0_i32_0 = arith.constant 0 : i32
    %c0_i32_1 = arith.constant 0 : i32
    return %arg0, %c0_i32, %c0_i32_0 : i32, i32, i32
  }
}

</mosaic_0001>

<llo_original>
// kernel: tpu_custom_call.1
$region0: #{tpu_custom_call.1}
  #allocation0 [shape = 'u32[]', space=smem, size = 0x4, offset = 0x4, fixed_abs, tag = 'smem constant byte address 0x4 - core index']
  #allocation1 [shape = 'u32[72,128]{1,0:T(1,128)}', space=vmem, size = 0x9000, scoped, tag = 'internal scratch']
  %s0 = inlined_call_operand.hbm [shape: f32[8,256], index: 0, kind: input, shape index: {}]
  %s1 = inlined_call_operand.hbm [shape: f32[1,8,8], index: 1, kind: output, shape index: {}]
  %s2 = sld [smem:[#allocation0]]
  $region22: #{tpu_custom_call.1} parent=0
    _
  %s4 = ssub.s32 1, %s2
  %s5 = scalar_select 0, %s4, %s2
  $region1: #{tpu_custom_call.1} parent=0
    #allocation2 [shape = 'u8[8192]{0}', space=vmem, size = 0x2000, scoped, tag = 'input window, operand 0, single buffered']
    #allocation3 [shape = 's32[1]{0}', space=sflag, size = 0x4, scoped, tag = 'scoped memory for tpu_custom_call.1']
    #allocation4 [shape = 's32[1]{0}', space=sflag, size = 0x4, scoped, tag = 'scoped memory for tpu_custom_call.1']
    #allocation5 [shape = 'u8[4096]{0}', space=vmem, size = 0x1000, scoped, tag = 'output window, operand 0, single buffered']
    %6 = vsyncpa [#allocation3], 0
    %7 = vsyncpa [#allocation4], 0
    // Predicated region
    $region2: #{tpu_custom_call.1} parent=1 // pred_check
      _
    $region3: #{tpu_custom_call.1} parent=1 // pred_check_branch
      %9 = sbr.rel (0) target = $region5
    $region4: #{tpu_custom_call.1} parent=1 // pred_region
      %s10 = sadd.s32 0, 0
      %p11 = scmp.lt.s32.totalorder %s10, 0
      %s12 = scalar_select %p11, %s10, 0
      %s13 = smul.u32 2, %s12
      %15 = vsyncadd [#allocation3], 0
      %s16 = smul.addr %s13, 8
      %s17 = scalar_lea.hbm %s0, %s16
      %s19 = sshll.u32 %s17, 4
      %s20 = int_to_ptr.hbm [resolvable:$true] %s19
      %s21 = sshll.u32 [#allocation2], 4
      %s22 = int_to_ptr.vmem [resolvable:$true] %s21
      %24 = dma.hbm_to_vmem [thread:$0]  %s20, 256, %s22, [#allocation3]
    $region5: #{tpu_custom_call.1} parent=1 // pred_fallthru
      _
    // Predicated region
    $region6: #{tpu_custom_call.1} parent=1 // pred_check
      _
    $region7: #{tpu_custom_call.1} parent=1 // pred_check_branch
      %26 = sbr.rel (0) target = $region9
    $region8: #{tpu_custom_call.1} parent=1 // pred_region
      %28 = dma.done [#allocation3], 256
    $region9: #{tpu_custom_call.1} parent=1 // pred_fallthru
      _
    %s29 = sadd.s32 0, 0
    %p30 = scmp.lt.s32.totalorder %s29, 0
    %s31 = scalar_select %p30, %s29, 0
    %s32 = smul.u32 2, %s31
    %p34 = scmp.eq.s32.totalorder 0, 0
    // Predicated region
    $region10: #{tpu_custom_call.1} parent=1 // pred_check
      %p35 = pneg %p34
    $region11: #{tpu_custom_call.1} parent=1 // pred_check_branch
      %37 = sbr.rel (%p35) target = $region13
    $region12: #{tpu_custom_call.1} parent=1 // pred_region
      %vm38 = vcmask 64512
      %39 = vst.msk [vmem:[#allocation5] sm:$0xff] %vm38, 0.0
    $region13: #{tpu_custom_call.1} parent=1 // pred_fallthru
      _
    %v40 = vld [vmem:[#allocation2] sm:$0xff]
    %v41 = vld [vmem:[#allocation2 + $0x8] sm:$0xff]
    %v42 = vpack.c.bf16 %v40, %v40
    %v43 = vpack.c.bf16 %v41, %v41
    %v44 = vld [vmem:[#allocation5] sm:$0xff]
    %45 = vmatpush.bf16.xpose.msra.mxu0 0
    %46 = vmatpush.bf16.xpose.msra.mxu0 0
    %47 = vmatpush.bf16.xpose.msra.mxu0 0
    %48 = vmatpush.bf16.xpose.msra.mxu0 0
    %49 = vmatpush.bf16.xpose.msra.mxu0 0
    %50 = vmatpush.bf16.xpose.msra.mxu0 0
    %51 = vmatpush.bf16.xpose.msra.mxu0 0
    %52 = vmatpush.bf16.xpose.msra.mxu0 %v42
    %53 = vmatmul.bf16.gmra.mxu0 %v42
    %v54 = vpop.f32.mrf.mxu0
    %v55 = vadd.f32 0.0, %v54
    %v56 = vpop.f32.mrf.mxu0
    %57 = vdwg.mxu0
    %58 = vmatpush.bf16.xpose.msra.mxu0 0
    %59 = vmatpush.bf16.xpose.msra.mxu0 0
    %60 = vmatpush.bf16.xpose.msra.mxu0 0
    %61 = vmatpush.bf16.xpose.msra.mxu0 0
    %62 = vmatpush.bf16.xpose.msra.mxu0 0
    %63 = vmatpush.bf16.xpose.msra.mxu0 0
    %64 = vmatpush.bf16.xpose.msra.mxu0 0
    %65 = vmatpush.bf16.xpose.msra.mxu0 %v43
    %66 = vmatmul.bf16.gmra.mxu0 %v43
    %v67 = vpop.f32.mrf.mxu0
    %v68 = vadd.f32 %v55, %v67
    %v69 = vpop.f32.mrf.mxu0
    %70 = vdwg.mxu0
    %v71 = vadd.f32 %v44, %v68
    %vm72 = vcmask 64512
    %73 = vst.msk [vmem:[#allocation5] sm:$0xff] %vm72, %v71
    // Predicated region
    $region14: #{tpu_custom_call.1} parent=1 // pred_check
      _
    $region15: #{tpu_custom_call.1} parent=1 // pred_check_branch
      %75 = sbr.rel (0) target = $region17
    $region16: #{tpu_custom_call.1} parent=1 // pred_region
      %77 = vsyncadd [#allocation4], 0
      %s79 = sshll.u32 [#allocation5], 4
      %s80 = int_to_ptr.vmem [resolvable:$true] %s79
      %s81 = sshll.u32 %s1, 4
      %s82 = int_to_ptr.hbm [resolvable:$true] %s81
      %84 = dma.vmem_to_hbm [thread:$0]  %s80, 128, %s82, [#allocation4]
    $region17: #{tpu_custom_call.1} parent=1 // pred_fallthru
      _
    // Predicated region
    $region18: #{tpu_custom_call.1} parent=1 // pred_check
      _
    $region19: #{tpu_custom_call.1} parent=1 // pred_check_branch
      %86 = sbr.rel (0) target = $region21
    $region20: #{tpu_custom_call.1} parent=1 // pred_region
      %88 = dma.done [#allocation4], 128
    $region21: #{tpu_custom_call.1} parent=1 // pred_fallthru
      _
    %89 = vsyncpa [#allocation3], 1
    %90 = vsyncpa [#allocation4], 1

</llo_original>
